<compile_context>
chip_gen: v6e
topology: v6e:2x2x1
jax: 0.10.0
libtpu: 0.0.40
codegen_flags: <defaults>
</compile_context>

<pallas_src>
import functools

import jax
import jax.numpy as jnp
from jax import lax
from jax.experimental import pallas as pl
from jax.experimental.pallas import tpu as pltpu


def _conv_res_kernel(p_ref, w1t_ref, b1_ref, w2t_ref, b2_ref, o_ref, *, cin):
    """All operands channel-major; pixel axis (cols) is the lane axis.

    p_ref   : (Kpad, cols)  im2col of the *unactivated*, zero-padded x,
                            tap-major: rows [t*Cin, (t+1)*Cin) are tap t=dy*3+dx.
    w1t_ref : (Cmid, Kpad)  3x3 conv weight, (dy,dx,cin)-flattened, transposed.
    b1_ref  : (Cmid, 1)     f32
    w2t_ref : (Cin,  Cmid)  1x1 conv weight, transposed.
    b2_ref  : (Cin,  1)     f32
    o_ref   : (Cin,  cols)
    """
    p_raw = p_ref[...]                                         # (Kpad, cols)

    # Residual = center tap (t = 4), read BEFORE the ReLU: exactly x.
    res = p_raw[4 * cin:5 * cin, :].astype(jnp.float32)        # (Cin, cols)

    # ReLU(x); ReLU of the zero padding (spatial halo and K-padding rows)
    # stays zero, so conv3x3(ReLU(x), pad=1) == w1^T @ ReLU(patches).
    p = jnp.maximum(p_raw, 0)

    # conv3x3 as ONE matmul: (Cmid, Kpad) @ (Kpad, cols), f32 accumulation.
    h = jnp.dot(w1t_ref[...], p, preferred_element_type=jnp.float32)
    h = jnp.maximum(h + b1_ref[...], 0.0)                      # f32 (Cmid, cols)

    # conv1x1: (Cin, Cmid) @ (Cmid, cols); bias + residual in f32.
    out = jnp.dot(w2t_ref[...], h.astype(w2t_ref.dtype),
                  preferred_element_type=jnp.float32)
    out = out + b2_ref[...] + res                              # (Cin, cols)

    o_ref[...] = out.astype(o_ref.dtype)


def _pick_cols_per_block(M, Kpad, Cin, compute_dtype,
                         vmem_budget_bytes=32 << 20):
    """Largest lane band that divides M, fits the VMEM budget (double-buffered
    patches in + f32 out), and keeps >= 2 grid steps when possible."""
    if M <= 128 or M % 128 != 0:
        return M
    isz = jnp.dtype(compute_dtype).itemsize
    bytes_per_col = 2 * Kpad * isz + 2 * Cin * 4
    cols = min(M, max(128, (vmem_budget_bytes // bytes_per_col) // 128 * 128))
    # keep at least 2 grid steps (megacore sharding + DMA/compute overlap)
    cols = min(cols, max(128, (M // 2) // 128 * 128))
    while cols > 128 and M % cols != 0:
        cols -= 128
    return cols if M % cols == 0 else M


def conv_res_block_pallas(x_nchw, w1, b1, w2, b2, *,
                          cols_per_block=None,
                          compute_dtype=None,
                          vmem_limit_bytes=None,
                          channel_major_output=False):
    """x_nchw: (N, Cin, H, W).
       w1: (3, 3, Cin, Cmid) HWIO, b1: (Cmid,), w2: (Cmid, Cin), b2: (Cin,)."""
    N, Cin, H, W = x_nchw.shape
    Cmid = w1.shape[-1]
    M = N * H * W                                   # pixel axis -> TPU lanes
    if compute_dtype is None:
        compute_dtype = x_nchw.dtype

    K = 9 * Cin
    Kpad = ((K + 7) // 8) * 8                       # sublane-aligned contraction

    # ---- trace-time layout prep (one pass each; no 9x-expanded transpose) ----
    # channel-major x (single small transpose of x itself), then spatial pad.
    x_t = x_nchw.transpose(1, 0, 2, 3)                           # (Cin,N,H,W)
    xp = jnp.pad(x_t, ((0, 0), (0, 0), (1, 1), (1, 1)))          # (Cin,N,H+2,W+2)
    # Stack taps tap-major so the reshape to (9*Cin, M) needs NO transpose.
    taps = jnp.stack([xp[:, :, dy:dy + H, dx:dx + W]
                      for dy in range(3) for dx in range(3)], axis=0)
    patches_t = taps.reshape(K, M).astype(compute_dtype)         # (9*Cin, M)
    if Kpad != K:
        patches_t = jnp.pad(patches_t, ((0, Kpad - K), (0, 0)))

    w1t = w1.reshape(K, Cmid).T.astype(compute_dtype)            # (Cmid, 9*Cin)
    if Kpad != K:
        w1t = jnp.pad(w1t, ((0, 0), (0, Kpad - K)))
    w2t = w2.T.astype(compute_dtype)                             # (Cin, Cmid)
    b1c = b1.reshape(Cmid, 1).astype(jnp.float32)
    b2c = b2.reshape(Cin, 1).astype(jnp.float32)

    # ---- grid: lane bands sized for VMEM, >= 2 steps when possible -----------
    if cols_per_block is None:
        cols_per_block = _pick_cols_per_block(M, Kpad, Cin, compute_dtype)
    assert M % cols_per_block == 0
    assert cols_per_block == M or cols_per_block % 128 == 0
    grid = (M // cols_per_block,)

    out_isz = jnp.dtype(x_nchw.dtype).itemsize
    cost = pl.CostEstimate(
        flops=2 * M * (Cmid * Kpad + Cin * Cmid),
        transcendentals=0,
        bytes_accessed=(patches_t.size * patches_t.dtype.itemsize
                        + w1t.size * w1t.dtype.itemsize
                        + w2t.size * w2t.dtype.itemsize
                        + (Cmid + Cin) * 4
                        + Cin * M * out_isz))

    out_t = pl.pallas_call(
        functools.partial(_conv_res_kernel, cin=Cin),
        out_shape=jax.ShapeDtypeStruct((Cin, M), x_nchw.dtype),
        grid=grid,
        in_specs=[
            pl.BlockSpec((Kpad, cols_per_block), lambda j: (0, j)),
            pl.BlockSpec((Cmid, Kpad), lambda j: (0, 0)),
            pl.BlockSpec((Cmid, 1), lambda j: (0, 0)),
            pl.BlockSpec((Cin, Cmid), lambda j: (0, 0)),
            pl.BlockSpec((Cin, 1), lambda j: (0, 0)),
        ],
        out_specs=pl.BlockSpec((Cin, cols_per_block), lambda j: (0, j)),
        compiler_params=pltpu.CompilerParams(
            dimension_semantics=("parallel",),
            vmem_limit_bytes=vmem_limit_bytes),
        cost_estimate=cost,
    )(patches_t, w1t, b1c, w2t, b2c)

    if channel_major_output:
        # Lane-dense (Cin, N*H*W): skips an extra HBM read+write pass when the
        # consumer accepts channel-major activations.
        return out_t
    return out_t.reshape(Cin, N, H, W).transpose(1, 0, 2, 3)


def conv_res_block_ref(x_nchw, w1, b1, w2, b2):
    """Pure-JAX reference (matches PyTorch nn.Conv2d semantics)."""
    r = jnp.maximum(x_nchw, 0.0)
    y = lax.conv_general_dilated(
        r, w1, window_strides=(1, 1), padding=((1, 1), (1, 1)),
        dimension_numbers=("NCHW", "HWIO", "NCHW"))
    y = y + b1.reshape(1, -1, 1, 1)
    y = jnp.maximum(y, 0.0)
    z = lax.conv_general_dilated(
        y, w2.reshape(1, 1, *w2.shape), window_strides=(1, 1), padding="VALID",
        dimension_numbers=("NCHW", "HWIO", "NCHW"))
    z = z + b2.reshape(1, -1, 1, 1)
    return z + x_nchw


# TODO(synk): partial_conv=True branch (PartialConv2d + mask interpolation) is
# not implemented (the reference module itself raises NotImplementedError).

if __name__ == "__main__":
    # Module config: in_channel=4, channel=8; input (2, 4, 16, 16).
    N, Cin, H, W = 2, 4, 16, 16
    Cmid = 8

    key = jax.random.PRNGKey(0)
    kx, k1, kb1, k2, kb2 = jax.random.split(key, 5)

    x = jax.random.normal(kx, (N, Cin, H, W), jnp.float32)
    # Deterministic synthetic parameters (HWIO layout for the 3x3 conv).
    w1 = 0.1 * jax.random.normal(k1, (3, 3, Cin, Cmid), jnp.float32)
    b1 = 0.1 * jax.random.normal(kb1, (Cmid,), jnp.float32)
    w2 = 0.1 * jax.random.normal(k2, (Cmid, Cin), jnp.float32)
    b2 = 0.1 * jax.random.normal(kb2, (Cin,), jnp.float32)

    ref = conv_res_block_ref(x, w1, b1, w2, b2)

    # f32 operand path: exact vs. the f32 reference.
    out = jax.block_until_ready(conv_res_block_pallas(x, w1, b1, w2, b2))
    assert out.shape == (N, Cin, H, W)
    assert jnp.allclose(out, ref, atol=1e-4, rtol=1e-4), \
        f"f32 path max abs err {jnp.max(jnp.abs(out - ref))}"

    # bf16 operand path (f32 accumulation; residual/bias adds in f32).
    out_bf16 = jax.block_until_ready(
        conv_res_block_pallas(x, w1, b1, w2, b2, compute_dtype=jnp.bfloat16))
    assert jnp.allclose(out_bf16, ref, atol=5e-2, rtol=5e-2), \
        f"bf16 path max abs err {jnp.max(jnp.abs(out_bf16 - ref))}"

    print("KERNEL_OK")
</pallas_src>

<mosaic_0001>
module attributes {stable_mosaic.version = 11 : i64} {
  func.func @_conv_res_kernel(%arg0: i32, %arg1: memref<40x256xf32, #tpu.memory_space<vmem>>, %arg2: memref<8x40xf32, #tpu.memory_space<vmem>>, %arg3: memref<8x1xf32, #tpu.memory_space<vmem>>, %arg4: memref<4x8xf32, #tpu.memory_space<vmem>>, %arg5: memref<4x1xf32, #tpu.memory_space<vmem>>, %arg6: memref<4x256xf32, #tpu.memory_space<vmem>>) attributes {dimension_semantics = [#tpu.dimension_semantics<parallel>], iteration_bounds = array<i64: 2>, scalar_prefetch = 0 : i64, scratch_operands = 0 : i64, tpu.core_type = #tpu.core_type<tc>, window_params = [{transform_indices = @transform_0, window_bounds = array<i64: 40, 256>}, {pipeline_mode = #tpu.pipeline_mode<synchronous>, transform_indices = @transform_1, window_bounds = array<i64: 8, 40>}, {pipeline_mode = #tpu.pipeline_mode<synchronous>, transform_indices = @transform_2, window_bounds = array<i64: 8, 1>}, {pipeline_mode = #tpu.pipeline_mode<synchronous>, transform_indices = @transform_3, window_bounds = array<i64: 4, 8>}, {pipeline_mode = #tpu.pipeline_mode<synchronous>, transform_indices = @transform_4, window_bounds = array<i64: 4, 1>}, {transform_indices = @transform_5, window_bounds = array<i64: 4, 256>}]} {
    %c0 = arith.constant 0 : index
    %c0_0 = arith.constant 0 : index
    %0 = vector.load %arg1[%c0, %c0_0] : memref<40x256xf32, #tpu.memory_space<vmem>>, vector<40x256xf32>
    %1 = vector.extract_strided_slice %0 {offsets = [16, 0], sizes = [4, 256], strides = [1, 1]} : vector<40x256xf32> to vector<4x256xf32>
    %cst = arith.constant 0.000000e+00 : f32
    %2 = vector.broadcast %cst : f32 to vector<40x256xf32>
    %3 = arith.maximumf %0, %2 : vector<40x256xf32>
    %c0_1 = arith.constant 0 : index
    %c0_2 = arith.constant 0 : index
    %4 = vector.load %arg2[%c0_1, %c0_2] : memref<8x40xf32, #tpu.memory_space<vmem>>, vector<8x40xf32>
    %cst_3 = arith.constant dense<0.000000e+00> : vector<8x256xf32>
    %5 = tpu.matmul %4, %3, %cst_3 {dimension_numbers = #tpu.dot_dimension_numbers<[1], [0], [0], [1], [0, 0, 1, 1], [], []>} : vector<8x40xf32>, vector<40x256xf32>, vector<8x256xf32> -> vector<8x256xf32>
    %c0_4 = arith.constant 0 : index
    %c0_5 = arith.constant 0 : index
    %6 = vector.load %arg3[%c0_4, %c0_5] : memref<8x1xf32, #tpu.memory_space<vmem>>, vector<8x1xf32>
    %7 = vector.broadcast %6 : vector<8x1xf32> to vector<8x256xf32>
    %8 = arith.addf %5, %7 : vector<8x256xf32>
    %cst_6 = arith.constant 0.000000e+00 : f32
    %9 = vector.broadcast %cst_6 : f32 to vector<8x256xf32>
    %10 = arith.maximumf %8, %9 : vector<8x256xf32>
    %c0_7 = arith.constant 0 : index
    %c0_8 = arith.constant 0 : index
    %11 = vector.load %arg4[%c0_7, %c0_8] : memref<4x8xf32, #tpu.memory_space<vmem>>, vector<4x8xf32>
    %cst_9 = arith.constant dense<0.000000e+00> : vector<4x256xf32>
    %12 = tpu.matmul %11, %10, %cst_9 {dimension_numbers = #tpu.dot_dimension_numbers<[1], [0], [0], [1], [0, 0, 1, 1], [], []>} : vector<4x8xf32>, vector<8x256xf32>, vector<4x256xf32> -> vector<4x256xf32>
    %c0_10 = arith.constant 0 : index
    %c0_11 = arith.constant 0 : index
    %13 = vector.load %arg5[%c0_10, %c0_11] : memref<4x1xf32, #tpu.memory_space<vmem>>, vector<4x1xf32>
    %14 = vector.broadcast %13 : vector<4x1xf32> to vector<4x256xf32>
    %15 = arith.addf %12, %14 : vector<4x256xf32>
    %16 = arith.addf %15, %1 : vector<4x256xf32>
    %c0_12 = arith.constant 0 : index
    %c0_13 = arith.constant 0 : index
    %17 = vector.load %arg6[%c0_12, %c0_13] : memref<4x256xf32, #tpu.memory_space<vmem>>, vector<4x256xf32>
    tpu.vector_store %arg6[%c0_12, %c0_13], %16 {strides = array<i32>} : memref<4x256xf32, #tpu.memory_space<vmem>>, vector<4x256xf32>,
    return
  }
  func.func @transform_0(%arg0: i32) -> (i32, i32) {
    %c0_i32 = arith.constant 0 : i32
    %c0_i32_0 = arith.constant 0 : i32
    return %c0_i32, %arg0 : i32, i32
  }
  func.func @transform_1(%arg0: i32) -> (i32, i32) {
    %c0_i32 = arith.constant 0 : i32
    %c0_i32_0 = arith.constant 0 : i32
    %c0_i32_1 = arith.constant 0 : i32
    return %c0_i32, %c0_i32_0 : i32, i32
  }
  func.func @transform_2(%arg0: i32) -> (i32, i32) {
    %c0_i32 = arith.constant 0 : i32
    %c0_i32_0 = arith.constant 0 : i32
    %c0_i32_1 = arith.constant 0 : i32
    return %c0_i32, %c0_i32_0 : i32, i32
  }
  func.func @transform_3(%arg0: i32) -> (i32, i32) {
    %c0_i32 = arith.constant 0 : i32
    %c0_i32_0 = arith.constant 0 : i32
    %c0_i32_1 = arith.constant 0 : i32
    return %c0_i32, %c0_i32_0 : i32, i32
  }
  func.func @transform_4(%arg0: i32) -> (i32, i32) {
    %c0_i32 = arith.constant 0 : i32
    %c0_i32_0 = arith.constant 0 : i32
    %c0_i32_1 = arith.constant 0 : i32
    return %c0_i32, %c0_i32_0 : i32, i32
  }
  func.func @transform_5(%arg0: i32) -> (i32, i32) {
    %c0_i32 = arith.constant 0 : i32
    %c0_i32_0 = arith.constant 0 : i32
    return %c0_i32, %arg0 : i32, i32
  }
}

</mosaic_0001>

<llo_original>
// kernel: tpu_custom_call.1
$region0: #{tpu_custom_call.1}
  #allocation0 [shape = 'u32[]', space=smem, size = 0x4, offset = 0x4, fixed_abs, tag = 'smem constant byte address 0x4 - core index']
  #allocation1 [shape = 'u32[144,128]{1,0:T(1,128)}', space=vmem, size = 0x12000, scoped, tag = 'internal scratch']
  %s0 = inlined_call_operand.hbm [shape: f32[40,512], index: 0, kind: input, shape index: {}]
  %s1 = inlined_call_operand.vmem [shape: f32[8,40], index: 1, kind: input, shape index: {}]
  %s2 = inlined_call_operand.vmem [shape: f32[8,1], index: 2, kind: input, shape index: {}]
  %s3 = inlined_call_operand.vmem [shape: f32[4,8], index: 3, kind: input, shape index: {}]
  %s4 = inlined_call_operand.vmem [shape: f32[4,1], index: 4, kind: input, shape index: {}]
  %s5 = inlined_call_operand.hbm [shape: f32[4,512], index: 5, kind: output, shape index: {}]
  %s6 = sld [smem:[#allocation0]]
  $region57: #{tpu_custom_call.1} parent=0
    _
  %s8 = ssub.s32 1, %s6
  %s9 = scalar_select 0, %s8, %s6
  $region1: #{tpu_custom_call.1} parent=0
    #allocation2 [shape = 'u8[81920]{0}', space=vmem, size = 0x14000, scoped, tag = 'input window, operand 0']
    #allocation3 [shape = 's32[2]{0}', space=sflag, size = 0x8, scoped, tag = 'scoped memory for tpu_custom_call.1']
    #allocation4 [shape = 's32[2]{0}', space=sflag, size = 0x8, scoped, tag = 'scoped memory for tpu_custom_call.1']
    #allocation5 [shape = 'u8[8192]{0}', space=vmem, size = 0x2000, scoped, tag = 'output window, operand 0']
    %10 = vsyncpa [#allocation3], 0
    %s11 = scalar_lea.sflag [#allocation3], 1
    %12 = vsyncpa %s11, 0
    %13 = vsyncpa [#allocation4], 0
    %s14 = scalar_lea.sflag [#allocation4], 1
    %15 = vsyncpa %s14, 0
    loop: start=0, step=1, limit=4
    $region2: #{tpu_custom_call.1} parent=1 // loop_pre_header
      _
    $region3: #{tpu_custom_call.1} parent=1 // loop_header
      %s17 = sphi 0, %s21
      %p18 = scmp.ge.s32.totalorder %s17, 4
      %s27 = sphi 0, %s29
      %s30 = sphi 0, %s27
      %s31 = sphi 0, %s30
      %s47 = sphi 0, %s31
      %s51 = sphi 0, %s51
      %s53 = sphi 0, %s51
      %s54 = sphi 0, %s53
      %s68 = sphi 0, %s54
      %s72 = sphi 0, %s72
      %s74 = sphi 0, %s72
      %s75 = sphi 0, %s74
      %s89 = sphi 0, %s75
      %s93 = sphi 0, %s93
      %s95 = sphi 0, %s93
      %s96 = sphi 0, %s95
      %s110 = sphi 0, %s96
      %s114 = sphi 0, %s114
      %s116 = sphi 0, %s114
      %s117 = sphi 0, %s116
      %s131 = sphi 0, %s117
      %s137 = sphi 0, %s139
      %s140 = sphi 0, %s137
      %s141 = sphi 0, %s140
      %s157 = sphi 0, %s141
    $region4: #{tpu_custom_call.1} parent=1 // loop_header_branch
      %20 = sbr.rel (%p18) target = $region8
    $region5: #{tpu_custom_call.1} parent=1 // loop_body
      %s22 = ssub.s32 %s17, 1
      %s23 = ssub.s32 %s17, 2
      %s24 = sadd.s32 %s17, 1
      %s25 = ssub.s32 %s17, %s24
      %p26 = scmp.eq.s32.totalorder %s25, 0
      %s28 = sadd.s32 %s27, 1
      %s29 = scalar_select %p26, %s27, %s28
      %p32 = pneg %p26
      %p33 = scmp.eq.s32.totalorder %s17, 1
      %p34 = por %p32, %p33
      %p35 = scmp.ne.s32.totalorder %s27, %s30
      %p36 = scmp.eq.s32.totalorder %s17, 0
      %p37 = por %p35, %p36
      %p38 = scmp.ne.s32.totalorder %s27, %s30
      %p39 = scmp.eq.s32.totalorder %s22, 1
      %p40 = por %p38, %p39
      %p41 = scmp.ne.s32.totalorder %s30, %s31
      %p42 = scmp.eq.s32.totalorder %s22, 0
      %p43 = por %p41, %p42
      %p44 = scmp.ne.s32.totalorder %s30, %s31
      %p45 = scmp.eq.s32.totalorder %s23, 1
      %p46 = por %p44, %p45
      %p48 = scmp.ne.s32.totalorder %s31, %s47
      %p49 = scmp.eq.s32.totalorder %s23, 0
      %p50 = por %p48, %p49
      %s52 = sadd.s32 %s51, 1
      %p55 = scmp.eq.s32.totalorder %s17, 1
      %p56 = scmp.ne.s32.totalorder %s51, %s53
      %p57 = scmp.eq.s32.totalorder %s17, 0
      %p58 = por %p56, %p57
      %p59 = scmp.ne.s32.totalorder %s51, %s53
      %p60 = scmp.eq.s32.totalorder %s22, 1
      %p61 = por %p59, %p60
      %p62 = scmp.ne.s32.totalorder %s53, %s54
      %p63 = scmp.eq.s32.totalorder %s22, 0
      %p64 = por %p62, %p63
      %p65 = scmp.ne.s32.totalorder %s53, %s54
      %p66 = scmp.eq.s32.totalorder %s23, 1
      %p67 = por %p65, %p66
      %p69 = scmp.ne.s32.totalorder %s54, %s68
      %p70 = scmp.eq.s32.totalorder %s23, 0
      %p71 = por %p69, %p70
      %s73 = sadd.s32 %s72, 1
      %p76 = scmp.eq.s32.totalorder %s17, 1
      %p77 = scmp.ne.s32.totalorder %s72, %s74
      %p78 = scmp.eq.s32.totalorder %s17, 0
      %p79 = por %p77, %p78
      %p80 = scmp.ne.s32.totalorder %s72, %s74
      %p81 = scmp.eq.s32.totalorder %s22, 1
      %p82 = por %p80, %p81
      %p83 = scmp.ne.s32.totalorder %s74, %s75
      %p84 = scmp.eq.s32.totalorder %s22, 0
      %p85 = por %p83, %p84
      %p86 = scmp.ne.s32.totalorder %s74, %s75
      %p87 = scmp.eq.s32.totalorder %s23, 1
      %p88 = por %p86, %p87
      %p90 = scmp.ne.s32.totalorder %s75, %s89
      %p91 = scmp.eq.s32.totalorder %s23, 0
      %p92 = por %p90, %p91
      %s94 = sadd.s32 %s93, 1
      %p97 = scmp.eq.s32.totalorder %s17, 1
      %p98 = scmp.ne.s32.totalorder %s93, %s95
      %p99 = scmp.eq.s32.totalorder %s17, 0
      %p100 = por %p98, %p99
      %p101 = scmp.ne.s32.totalorder %s93, %s95
      %p102 = scmp.eq.s32.totalorder %s22, 1
      %p103 = por %p101, %p102
      %p104 = scmp.ne.s32.totalorder %s95, %s96
      %p105 = scmp.eq.s32.totalorder %s22, 0
      %p106 = por %p104, %p105
      %p107 = scmp.ne.s32.totalorder %s95, %s96
      %p108 = scmp.eq.s32.totalorder %s23, 1
      %p109 = por %p107, %p108
      %p111 = scmp.ne.s32.totalorder %s96, %s110
      %p112 = scmp.eq.s32.totalorder %s23, 0
      %p113 = por %p111, %p112
      %s115 = sadd.s32 %s114, 1
      %p118 = scmp.eq.s32.totalorder %s17, 1
      %p119 = scmp.ne.s32.totalorder %s114, %s116
      %p120 = scmp.eq.s32.totalorder %s17, 0
      %p121 = por %p119, %p120
      %p122 = scmp.ne.s32.totalorder %s114, %s116
      %p123 = scmp.eq.s32.totalorder %s22, 1
      %p124 = por %p122, %p123
      %p125 = scmp.ne.s32.totalorder %s116, %s117
      %p126 = scmp.eq.s32.totalorder %s22, 0
      %p127 = por %p125, %p126
      %p128 = scmp.ne.s32.totalorder %s116, %s117
      %p129 = scmp.eq.s32.totalorder %s23, 1
      %p130 = por %p128, %p129
      %p132 = scmp.ne.s32.totalorder %s117, %s131
      %p133 = scmp.eq.s32.totalorder %s23, 0
      %p134 = por %p132, %p133
      %s135 = ssub.s32 %s17, %s24
      %p136 = scmp.eq.s32.totalorder %s135, 0
      %s138 = sadd.s32 %s137, 1
      %s139 = scalar_select %p136, %s137, %s138
      %p142 = pneg %p136
      %p143 = scmp.eq.s32.totalorder %s17, 1
      %p144 = por %p142, %p143
      %p145 = scmp.ne.s32.totalorder %s137, %s140
      %p146 = scmp.eq.s32.totalorder %s17, 0
      %p147 = por %p145, %p146
      %p148 = scmp.ne.s32.totalorder %s137, %s140
      %p149 = scmp.eq.s32.totalorder %s22, 1
      %p150 = por %p148, %p149
      %p151 = scmp.ne.s32.totalorder %s140, %s141
      %p152 = scmp.eq.s32.totalorder %s22, 0
      %p153 = por %p151, %p152
      %p154 = scmp.ne.s32.totalorder %s140, %s141
      %p155 = scmp.eq.s32.totalorder %s23, 1
      %p156 = por %p154, %p155
      %p158 = scmp.ne.s32.totalorder %s141, %s157
      %p159 = scmp.eq.s32.totalorder %s23, 0
      %p160 = por %p158, %p159
      %p161 = scmp.le.s32.totalorder 1, %s17
      %p162 = scmp.lt.s32.totalorder %s17, 3
      %p163 = pnand %p161, %p162
      %p164 = pneg %p163
      // Predicated region
      $region9: #{tpu_custom_call.1} parent=5 // pred_check
        _
      $region10: #{tpu_custom_call.1} parent=5 // pred_check_branch
        %166 = sbr.rel (%p163) target = $region12
      $region11: #{tpu_custom_call.1} parent=5 // pred_region
        %s167 = ssub.s32 %s17, 1
        // Predicated region
        $region13: #{tpu_custom_call.1} parent=11 // pred_check
          %p168 = pneg %p64
        $region14: #{tpu_custom_call.1} parent=11 // pred_check_branch
          %170 = sbr.rel (%p168) target = $region16
        $region15: #{tpu_custom_call.1} parent=11 // pred_region
          _
        $region16: #{tpu_custom_call.1} parent=11 // pred_fallthru
          _
        // Predicated region
        $region17: #{tpu_custom_call.1} parent=11 // pred_check
          %p171 = pneg %p85
        $region18: #{tpu_custom_call.1} parent=11 // pred_check_branch
          %173 = sbr.rel (%p171) target = $region20
        $region19: #{tpu_custom_call.1} parent=11 // pred_region
          _
        $region20: #{tpu_custom_call.1} parent=11 // pred_fallthru
          _
        // Predicated region
        $region21: #{tpu_custom_call.1} parent=11 // pred_check
          %p174 = pneg %p106
        $region22: #{tpu_custom_call.1} parent=11 // pred_check_branch
          %176 = sbr.rel (%p174) target = $region24
        $region23: #{tpu_custom_call.1} parent=11 // pred_region
          _
        $region24: #{tpu_custom_call.1} parent=11 // pred_fallthru
          _
        // Predicated region
        $region25: #{tpu_custom_call.1} parent=11 // pred_check
          %p177 = pneg %p127
        $region26: #{tpu_custom_call.1} parent=11 // pred_check_branch
          %179 = sbr.rel (%p177) target = $region28
        $region27: #{tpu_custom_call.1} parent=11 // pred_region
          _
        $region28: #{tpu_custom_call.1} parent=11 // pred_fallthru
          _
      $region12: #{tpu_custom_call.1} parent=5 // pred_fallthru
        _
      %p180 = scmp.lt.s32.totalorder %s17, 2
      // Predicated region
      $region29: #{tpu_custom_call.1} parent=5 // pred_check
        %p181 = pneg %p180
      $region30: #{tpu_custom_call.1} parent=5 // pred_check_branch
        %183 = sbr.rel (%p181) target = $region32
      $region31: #{tpu_custom_call.1} parent=5 // pred_region
        // Predicated region
        $region33: #{tpu_custom_call.1} parent=31 // pred_check
          %p184 = pneg %p37
        $region34: #{tpu_custom_call.1} parent=31 // pred_check_branch
          %186 = sbr.rel (%p184) target = $region36
        $region35: #{tpu_custom_call.1} parent=31 // pred_region
          %s187 = sand.u32 %s27, 1
          %s188 = scalar_lea.sflag [#allocation3], %s187
          %s189 = sand.u32 %s27, 1
          %s190 = smul.addr %s189, 80
          %s191 = scalar_lea.vmem [#allocation2], %s190
          %s192 = smul.u32 2, %s17
          %s194 = ssub.s32 1280, 1280
          %195 = vsyncadd %s188, %s194
          %s196 = smul.addr %s192, 128
          %s197 = scalar_lea.hbm %s0, %s196
          %s198 = sshll.u32 %s191, 4
          %s199 = int_to_ptr.vmem [resolvable:$true] %s198
          %204 = dma.hbm_to_vmem [thread:$0]  %s197, 1280, %s199, %s188, 512, 256, 16
        $region36: #{tpu_custom_call.1} parent=31 // pred_fallthru
          _
      $region32: #{tpu_custom_call.1} parent=5 // pred_fallthru
        _
      %p205 = scmp.le.s32.totalorder 1, %s17
      %p206 = scmp.lt.s32.totalorder %s17, 3
      %p207 = pnand %p205, %p206
      %p208 = pneg %p207
      // Predicated region
      $region37: #{tpu_custom_call.1} parent=5 // pred_check
        _
      $region38: #{tpu_custom_call.1} parent=5 // pred_check_branch
        %210 = sbr.rel (%p207) target = $region40
      $region39: #{tpu_custom_call.1} parent=5 // pred_region
        %s211 = ssub.s32 %s17, 1
        %s212 = sand.u32 %s30, 1
        %s213 = scalar_lea.sflag [#allocation3], %s212
        %s214 = sand.u32 %s30, 1
        %s215 = smul.addr %s214, 80
        %s216 = scalar_lea.vmem [#allocation2], %s215
        // Predicated region
        $region41: #{tpu_custom_call.1} parent=39 // pred_check
          %p217 = pneg %p43
        $region42: #{tpu_custom_call.1} parent=39 // pred_check_branch
          %219 = sbr.rel (%p217) target = $region44
        $region43: #{tpu_custom_call.1} parent=39 // pred_region
          %220 = dma.done %s213, 1280
        $region44: #{tpu_custom_call.1} parent=39 // pred_fallthru
          _
        %s221 = sand.u32 %s30, 1
        %s222 = scalar_lea.sflag [#allocation3], %s221
        %s223 = sand.u32 %s30, 1
        %s224 = smul.addr %s223, 80
        %s225 = scalar_lea.vmem [#allocation2], %s224
        %p226 = pneg %p43
        %p227 = pneg %p40
        %p228 = pneg %p64
        %p229 = pneg %p61
        %p230 = pneg %p85
        %p231 = pneg %p82
        %p232 = pneg %p106
        %p233 = pneg %p103
        %p234 = pneg %p127
        %p235 = pneg %p124
        %p236 = pneg %p153
        %p237 = pneg %p150
        %s238 = sand.u32 %s140, 1
        %s239 = scalar_lea.sflag [#allocation4], %s238
        %s240 = sand.u32 %s140, 1
        %s241 = smul.addr %s240, 8
        %s242 = scalar_lea.vmem [#allocation5], %s241
        %s243 = smul.u32 2, %s22
        %s244 = smul.u32 2, %s22
        %v245 = vld [vmem:[%s216] sm:$0xff]
        %v246 = vld [vmem:[%s216 + $0x8] sm:$0xff]
        %v247 = vld [vmem:[%s216 + $0x10] sm:$0xff]
        %v248 = vld [vmem:[%s216 + $0x18] sm:$0xff]
        %v249 = vld [vmem:[%s216 + $0x20] sm:$0xff]
        %v250 = vld [vmem:[%s216 + $0x28] sm:$0xff]
        %v251 = vld [vmem:[%s216 + $0x30] sm:$0xff]
        %v252 = vld [vmem:[%s216 + $0x38] sm:$0xff]
        %v253 = vld [vmem:[%s216 + $0x40] sm:$0xff]
        %v254 = vld [vmem:[%s216 + $0x48] sm:$0xff]
        %v255 = vmax.f32 %v245, 0.0
        %v256 = vmax.f32 %v246, 0.0
        %v257 = vmax.f32 %v247, 0.0
        %v258 = vmax.f32 %v248, 0.0
        %v259 = vmax.f32 %v249, 0.0
        %v260 = vmax.f32 %v250, 0.0
        %v261 = vmax.f32 %v251, 0.0
        %v262 = vmax.f32 %v252, 0.0
        %v263 = vmax.f32 %v253, 0.0
        %v264 = vmax.f32 %v254, 0.0
        %v265 = vld [vmem:[%s1] sm:$0xff]
        %v266 = vld [vmem:[%s2] sm:$0xff]
        %268 = vset.pattern.permute.xlu0 0
        %269 = vperm.xlu0 %268, %v266
        %v270 = vpop.permute.xlu0 %269
        %vm272 = vcmask 326656
        %v274 = vsel %vm272, %v265, 0
        %276 = vmatprep.subr.mxu0 0.0
        %277 = vmatpush1.msra.mxu0 0.0
        %278 = vmatprep.subr.mxu0 0.0
        %279 = vmatpush1.msra.mxu0 0.0
        %280 = vmatprep.subr.mxu0 0.0
        %281 = vmatpush1.msra.mxu0 0.0
        %282 = vmatprep.subr.mxu0 0.0
        %283 = vmatpush1.msra.mxu0 0.0
        %284 = vmatprep.subr.mxu0 0.0
        %285 = vmatpush1.msra.mxu0 0.0
        %286 = vmatprep.subr.mxu0 0.0
        %287 = vmatpush1.msra.mxu0 0.0
        %288 = vmatprep.subr.mxu0 0.0
        %289 = vmatpush1.msra.mxu0 0.0
        %290 = vmatprep.subr.mxu0 0.0
        %291 = vmatpush1.msra.mxu0 0.0
        %292 = vmatprep.subr.mxu0 0.0
        %293 = vmatpush1.msra.mxu0 0.0
        %294 = vmatprep.subr.mxu0 0.0
        %295 = vmatpush1.msra.mxu0 0.0
        %296 = vmatprep.subr.mxu0 0.0
        %297 = vmatpush1.msra.mxu0 0.0
        %298 = vmatprep.subr.mxu0 %v264
        %299 = vmatpush1.msra.mxu0 %v263
        %300 = vmatprep.subr.mxu0 %v262
        %301 = vmatpush1.msra.mxu0 %v261
        %302 = vmatprep.subr.mxu0 %v260
        %303 = vmatpush1.msra.mxu0 %v259
        %304 = vmatprep.subr.mxu0 %v258
        %305 = vmatpush1.msra.mxu0 %v257
        %306 = vmatprep.subr.mxu0 %v256
        %307 = vmatpush1.msra.mxu0 %v255
        %308 = vmatprep.subr.mxu0 0.0
        %309 = vmatpush2.msra.mxu0 0.0
        %310 = vmatprep.subr.mxu0 0.0
        %311 = vmatpush2.msra.mxu0 0.0
        %312 = vmatprep.subr.mxu0 0.0
        %313 = vmatpush2.msra.mxu0 0.0
        %314 = vmatprep.subr.mxu0 0.0
        %315 = vmatpush2.msra.mxu0 0.0
        %316 = vmatprep.subr.mxu0 0.0
        %317 = vmatpush2.msra.mxu0 0.0
        %318 = vmatprep.subr.mxu0 0.0
        %319 = vmatpush2.msra.mxu0 0.0
        %320 = vmatprep.subr.mxu0 0.0
        %321 = vmatpush2.msra.mxu0 0.0
        %322 = vmatprep.subr.mxu0 0.0
        %323 = vmatpush2.msra.mxu0 0.0
        %324 = vmatprep.subr.mxu0 0.0
        %325 = vmatpush2.msra.mxu0 0.0
        %326 = vmatprep.subr.mxu0 0.0
        %327 = vmatpush2.msra.mxu0 0.0
        %328 = vmatprep.subr.mxu0 0.0
        %329 = vmatpush2.msra.mxu0 0.0
        %330 = vmatprep.subr.mxu0 0.0
        %331 = vmatpush2.msra.mxu0 0.0
        %332 = vmatprep.subr.mxu0 0.0
        %333 = vmatpush2.msra.mxu0 0.0
        %334 = vmatprep.subr.mxu0 0.0
        %335 = vmatpush2.msra.mxu0 0.0
        %336 = vmatprep.subr.mxu0 0.0
        %337 = vmatpush2.msra.mxu0 0.0
        %338 = vmatprep.subr.mxu0 0.0
        %339 = vmatpush2.msra.mxu0 0.0
        %340 = vmatprep.mubr.f32.mxu0 0.0
        %341 = vmatmul.mubr.f32.gmra.mxu0 %v274
        %v342 = vpop.f32.mrf.mxu0
        %v343 = vadd.f32 %v270, %v342
        %v344 = vpop.f32.mrf.mxu0
        %v345 = vadd.f32 %v270, %v344
        %346 = vdwg.mxu0
        %v347 = vmax.f32 %v343, 0.0
        %v348 = vmax.f32 %v345, 0.0
        %v349 = vld [vmem:[%s3] sm:$0xf]
        %v350 = vld [vmem:[%s4] sm:$0xf]
        %352 = vset.pattern.permute.xlu0 0
        %353 = vperm.xlu0 %352, %v350
        %v354 = vpop.permute.xlu0 %353
        %vm356 = vcmask 64512
        %v358 = vsel %vm356, %v349, 0
        %360 = vmatprep.subr.mxu0 0.0
        %361 = vmatpush1.msra.mxu0 0.0
        %362 = vmatprep.subr.mxu0 0.0
        %363 = vmatpush1.msra.mxu0 0.0
        %364 = vmatprep.subr.mxu0 0.0
        %365 = vmatpush1.msra.mxu0 0.0
        %366 = vmatprep.subr.mxu0 0.0
        %367 = vmatpush1.msra.mxu0 0.0
        %368 = vmatprep.subr.mxu0 0.0
        %369 = vmatpush1.msra.mxu0 0.0
        %370 = vmatprep.subr.mxu0 0.0
        %371 = vmatpush1.msra.mxu0 0.0
        %372 = vmatprep.subr.mxu0 0.0
        %373 = vmatpush1.msra.mxu0 0.0
        %374 = vmatprep.subr.mxu0 0.0
        %375 = vmatpush1.msra.mxu0 0.0
        %376 = vmatprep.subr.mxu0 0.0
        %377 = vmatpush1.msra.mxu0 0.0
        %378 = vmatprep.subr.mxu0 0.0
        %379 = vmatpush1.msra.mxu0 0.0
        %380 = vmatprep.subr.mxu0 0.0
        %381 = vmatpush1.msra.mxu0 0.0
        %382 = vmatprep.subr.mxu0 0.0
        %383 = vmatpush1.msra.mxu0 0.0
        %384 = vmatprep.subr.mxu0 0.0
        %385 = vmatpush1.msra.mxu0 0.0
        %386 = vmatprep.subr.mxu0 0.0
        %387 = vmatpush1.msra.mxu0 0.0
        %388 = vmatprep.subr.mxu0 0.0
        %389 = vmatpush1.msra.mxu0 0.0
        %390 = vmatprep.subr.mxu0 %v348
        %391 = vmatpush1.msra.mxu0 %v347
        %392 = vmatprep.subr.mxu0 0.0
        %393 = vmatpush2.msra.mxu0 0.0
        %394 = vmatprep.subr.mxu0 0.0
        %395 = vmatpush2.msra.mxu0 0.0
        %396 = vmatprep.subr.mxu0 0.0
        %397 = vmatpush2.msra.mxu0 0.0
        %398 = vmatprep.subr.mxu0 0.0
        %399 = vmatpush2.msra.mxu0 0.0
        %400 = vmatprep.subr.mxu0 0.0
        %401 = vmatpush2.msra.mxu0 0.0
        %402 = vmatprep.subr.mxu0 0.0
        %403 = vmatpush2.msra.mxu0 0.0
        %404 = vmatprep.subr.mxu0 0.0
        %405 = vmatpush2.msra.mxu0 0.0
        %406 = vmatprep.subr.mxu0 0.0
        %407 = vmatpush2.msra.mxu0 0.0
        %408 = vmatprep.subr.mxu0 0.0
        %409 = vmatpush2.msra.mxu0 0.0
        %410 = vmatprep.subr.mxu0 0.0
        %411 = vmatpush2.msra.mxu0 0.0
        %412 = vmatprep.subr.mxu0 0.0
        %413 = vmatpush2.msra.mxu0 0.0
        %414 = vmatprep.subr.mxu0 0.0
        %415 = vmatpush2.msra.mxu0 0.0
        %416 = vmatprep.subr.mxu0 0.0
        %417 = vmatpush2.msra.mxu0 0.0
        %418 = vmatprep.subr.mxu0 0.0
        %419 = vmatpush2.msra.mxu0 0.0
        %420 = vmatprep.subr.mxu0 0.0
        %421 = vmatpush2.msra.mxu0 0.0
        %422 = vmatprep.subr.mxu0 0.0
        %423 = vmatpush2.msra.mxu0 0.0
        %424 = vmatprep.mubr.f32.mxu0 0.0
        %425 = vmatmul.mubr.f32.gmra.mxu0 %v358
        %v426 = vpop.f32.mrf.mxu0
        %v427 = vadd.f32 %v354, %v426
        %v428 = vpop.f32.mrf.mxu0
        %v429 = vadd.f32 %v354, %v428
        %430 = vdwg.mxu0
        %v431 = vadd.f32 %v427, %v249
        %v432 = vadd.f32 %v429, %v250
        %v435 = vcombine.low %v431, %v432
        %437 = vst [vmem:[%s242] sm:$0xff] %v435
        %s438 = sand.u32 %s140, 1
        %s439 = scalar_lea.sflag [#allocation4], %s438
        %s440 = sand.u32 %s140, 1
        %s441 = smul.addr %s440, 8
        %s442 = scalar_lea.vmem [#allocation5], %s441
        // Predicated region
        $region45: #{tpu_custom_call.1} parent=39 // pred_check
          %p443 = pneg %p150
        $region46: #{tpu_custom_call.1} parent=39 // pred_check_branch
          %445 = sbr.rel (%p443) target = $region48
        $region47: #{tpu_custom_call.1} parent=39 // pred_region
          %s446 = smul.u32 2, %s22
          %s448 = ssub.s32 128, 128
          %449 = vsyncadd %s439, %s448
          %s450 = smul.addr %s446, 64
          %s451 = scalar_lea.hbm %s5, %s450
          %s453 = sshll.u32 %s442, 4
          %s454 = int_to_ptr.vmem [resolvable:$true] %s453
          %456 = dma.vmem_to_hbm [thread:$0]  %s454, 128, %s451, %s439
        $region48: #{tpu_custom_call.1} parent=39 // pred_fallthru
          _
      $region40: #{tpu_custom_call.1} parent=5 // pred_fallthru
        _
      %p457 = scmp.le.s32.totalorder 2, %s17
      // Predicated region
      $region49: #{tpu_custom_call.1} parent=5 // pred_check
        %p458 = pneg %p457
      $region50: #{tpu_custom_call.1} parent=5 // pred_check_branch
        %460 = sbr.rel (%p458) target = $region52
      $region51: #{tpu_custom_call.1} parent=5 // pred_region
        %s461 = ssub.s32 %s17, 2
        // Predicated region
        $region53: #{tpu_custom_call.1} parent=51 // pred_check
          %p462 = pneg %p156
        $region54: #{tpu_custom_call.1} parent=51 // pred_check_branch
          %464 = sbr.rel (%p462) target = $region56
        $region55: #{tpu_custom_call.1} parent=51 // pred_region
          %s465 = sand.u32 %s141, 1
          %s466 = scalar_lea.sflag [#allocation4], %s465
          %s467 = sand.u32 %s141, 1
          %s468 = smul.addr %s467, 8
          %s469 = scalar_lea.vmem [#allocation5], %s468
          %470 = dma.done %s466, 128
        $region56: #{tpu_custom_call.1} parent=51 // pred_fallthru
          _
      $region52: #{tpu_custom_call.1} parent=5 // pred_fallthru
        _
    $region6: #{tpu_custom_call.1} parent=1 // loop_footer
      %s21 = sadd.s32 1, %s17
    $region7: #{tpu_custom_call.1} parent=1 // loop_footer_branch
      %16 = sbr.rel target = $region3
    $region8: #{tpu_custom_call.1} parent=1 // loop_exit
      _
    %471 = vsyncpa [#allocation3], 1
    %s472 = scalar_lea.sflag [#allocation3], 1
    %473 = vsyncpa %s472, 1
    %474 = vsyncpa [#allocation4], 1
    %s475 = scalar_lea.sflag [#allocation4], 1
    %476 = vsyncpa %s475, 1

</llo_original>
